<compile_context>
chip_gen: v7x
topology: tpu7x:2x2x1
jax: 0.10.0
libtpu: 0.0.40
codegen_flags: <defaults>
</compile_context>

<pallas_src>
import jax
import jax.numpy as jnp
from jax.experimental import pallas as pl
from jax.experimental.pallas import tpu as pltpu

EMBED_SIZE = 128      # stand-in for self.model.projection_dim
NUM_HEADS = 8
HEAD_DIM = EMBED_SIZE // NUM_HEADS

MIN_TILE_B = 128      # lane-aligned (output block puts batch on lanes)
MAX_TILE_B = 2048     # ~1 MiB f32 tile, double-buffered ~2 MiB << VMEM on all gens


def _choose_tile_b(batch: int) -> int:
    """Pick a batch tile: multiple of 128, capped at 2048, aiming for >=4 grid
    steps at large batch so both v7x TensorCores get at least two steps each."""
    target = -(-batch // 4)                       # cdiv(batch, 4)
    tile = ((target + 127) // 128) * 128          # round up to lane multiple
    return max(MIN_TILE_B, min(MAX_TILE_B, tile))


def _critic_kernel(txt_ref, w_ref, b_ref, out_ref):
    """scores_row[0, j] = sum_e w[0, e] * txt[j, e] + b   (lane-dense output).

    txt_ref : (TILE_B, E) VMEM  text/value embeddings for this batch tile
    w_ref   : (1, E)      VMEM  folded  Wv.T @ Wo.T @ Wfc.T  (row vector)
    b_ref   : (1,)        SMEM  folded scalar bias
    out_ref : (1, TILE_B) VMEM  scores, batch on lanes
    """
    # Contract the embed axis of both operands directly -> no (TILE_B,E) transpose.
    s = jax.lax.dot_general(
        w_ref[...], txt_ref[...],
        dimension_numbers=(((1,), (1,)), ((), ())),
        preferred_element_type=jnp.float32)
    out_ref[...] = s + b_ref[0]


def pack_params(params):
    """One-time fold of the PyTorch parameters into the kernel layout (f32).

    scores = ((txt @ Wv.T + bv) @ Wo.T + bo) @ Wfc.T + bfc
           = txt @ (Wv.T @ Wo.T @ Wfc.T) + (bv @ Wo.T @ Wfc.T + bo @ Wfc.T + bfc)

    Only valid because the K/V sequence length is exactly 1 (softmax == 1).
    """
    E = params["out_proj_weight"].shape[0]
    wv = params["in_proj_weight"][2 * E:3 * E]            # (E, E)  V projection
    bv = params["in_proj_bias"][2 * E:3 * E]              # (E,)
    wo = params["out_proj_weight"]                        # (E, E)
    bo = params["out_proj_bias"]                          # (E,)
    fw = params["fc_weight"]                              # (1, E)
    fb = params["fc_bias"]                                # (1,)

    wo_fc = wo.T @ fw.T                                   # (E, 1)
    w_fold = wv.T @ wo_fc                                 # (E, 1)
    b_fold = bv @ wo_fc + bo @ fw.T + fb                  # (1,)
    return {
        "w_row": w_fold.reshape(1, E).astype(jnp.float32),
        "b": b_fold.reshape(1).astype(jnp.float32),
    }


@jax.jit
def multiframe_critic_scores(image_embeds, text_embeds, packed):
    """image_embeds, text_embeds: (B, E) or (B, 1, E) -> scores (B,) f32.

    image_embeds is accepted for API fidelity with the PyTorch module, but with a
    single key/value token the attention weights are exactly 1, so the scores do
    not depend on the query at all; it is never DMA'd into the kernel.
    """
    del image_embeds
    if text_embeds.ndim == 3:
        # The weight fold is ONLY valid for a single K/V token.
        assert text_embeds.shape[1] == 1, "MultiFrameCritic fold requires seq_len == 1"
        text_embeds = text_embeds[:, 0, :]
    B, E = text_embeds.shape
    assert E % 128 == 0, "embed dim must be lane-aligned"

    tile_b = _choose_tile_b(B)
    grid = pl.cdiv(B, tile_b)      # ragged final block handled by Pallas (no jnp.pad)

    out = pl.pallas_call(
        _critic_kernel,
        out_shape=jax.ShapeDtypeStruct((1, B), jnp.float32),
        grid=(grid,),
        in_specs=[
            pl.BlockSpec((tile_b, E), lambda i: (i, 0)),      # batch tile of text embeds
            pl.BlockSpec((1, E), lambda i: (0, 0)),           # folded weight row (VMEM)
            pl.BlockSpec(memory_space=pltpu.MemorySpace.SMEM),  # folded scalar bias
        ],
        out_specs=pl.BlockSpec((1, tile_b), lambda i: (0, i)),  # batch on lanes
        compiler_params=pltpu.CompilerParams(
            dimension_semantics=("parallel",)),               # v7x: both TCs split batch
        cost_estimate=pl.CostEstimate(
            flops=2 * B * E,
            transcendentals=0,
            bytes_accessed=4 * (B * E + E + B)),
    )(text_embeds, packed["w_row"], packed["b"])
    return out[0]                                             # squeeze(-1)


def _reference_scores(image_embeds, text_embeds, params):
    """Pure-JAX reference of the full PyTorch cross_attention + fc path."""
    E = EMBED_SIZE
    in_w, in_b = params["in_proj_weight"], params["in_proj_bias"]
    q = image_embeds @ in_w[:E].T + in_b[:E]
    k = text_embeds @ in_w[E:2 * E].T + in_b[E:2 * E]
    v = text_embeds @ in_w[2 * E:].T + in_b[2 * E:]
    B = q.shape[0]
    q3 = q.reshape(B, NUM_HEADS, HEAD_DIM)
    k3 = k.reshape(B, NUM_HEADS, HEAD_DIM)
    v3 = v.reshape(B, NUM_HEADS, HEAD_DIM)
    scores = jnp.sum(q3 * k3, axis=-1, keepdims=True) / jnp.sqrt(jnp.float32(HEAD_DIM))
    w = jax.nn.softmax(scores, axis=-1)                    # single key -> exactly ones
    attn = (w * v3).reshape(B, E)
    o = attn @ params["out_proj_weight"].T + params["out_proj_bias"]
    s = o @ params["fc_weight"].T + params["fc_bias"]
    return s[:, 0]


def _init_params(key):
    E = EMBED_SIZE
    ks = jax.random.split(key, 6)
    scale = 1.0 / jnp.sqrt(jnp.float32(E))
    return {
        "in_proj_weight":  jax.random.normal(ks[0], (3 * E, E), jnp.float32) * scale,
        "in_proj_bias":    jax.random.normal(ks[1], (3 * E,), jnp.float32) * 0.01,
        "out_proj_weight": jax.random.normal(ks[2], (E, E), jnp.float32) * scale,
        "out_proj_bias":   jax.random.normal(ks[3], (E,), jnp.float32) * 0.01,
        "fc_weight":       jax.random.normal(ks[4], (1, E), jnp.float32) * scale,
        "fc_bias":         jax.random.normal(ks[5], (1,), jnp.float32) * 0.01,
    }


if __name__ == "__main__":
    key = jax.random.PRNGKey(0)
    k_img, k_txt, k_par = jax.random.split(key, 3)

    params = _init_params(k_par)
    packed = pack_params(params)   # one-time weight fold, outside the jitted path

    # Case 1: batch divides the tile exactly (B=256 -> tile 128, 2 parallel steps).
    B = 256
    image_embeds = jax.random.normal(k_img, (B, EMBED_SIZE), jnp.float32)
    text_embeds = jax.random.normal(k_txt, (B, EMBED_SIZE), jnp.float32)
    image_embeds = image_embeds / jnp.linalg.norm(image_embeds, axis=-1, keepdims=True)
    text_embeds = text_embeds / jnp.linalg.norm(text_embeds, axis=-1, keepdims=True)

    scores = multiframe_critic_scores(image_embeds, text_embeds, packed)
    scores = jax.block_until_ready(scores)
    ref = _reference_scores(image_embeds, text_embeds, params)
    assert scores.shape == (B,)
    assert jnp.allclose(scores, ref, atol=1e-4, rtol=1e-4), (scores, ref)

    # Case 2: ragged final block (no wrapper-side padding).
    B2 = 200
    scores2 = multiframe_critic_scores(image_embeds[:B2], text_embeds[:B2], packed)
    scores2 = jax.block_until_ready(scores2)
    ref2 = _reference_scores(image_embeds[:B2], text_embeds[:B2], params)
    assert scores2.shape == (B2,)
    assert jnp.allclose(scores2, ref2, atol=1e-4, rtol=1e-4), (scores2, ref2)

    print("KERNEL_OK")
</pallas_src>

<mosaic_0001>
module attributes {stable_mosaic.version = 11 : i64} {
  func.func @_critic_kernel(%arg0: i32, %arg1: memref<128x128xf32, #tpu.memory_space<vmem>>, %arg2: memref<1x128xf32, #tpu.memory_space<vmem>>, %arg3: memref<1xf32, #tpu.memory_space<smem>>, %arg4: memref<1x128xf32, #tpu.memory_space<vmem>>) attributes {dimension_semantics = [#tpu.dimension_semantics<parallel>], iteration_bounds = array<i64: 2>, scalar_prefetch = 0 : i64, scratch_operands = 0 : i64, tpu.core_type = #tpu.core_type<tc>, window_params = [{transform_indices = @transform_0, window_bounds = array<i64: 128, 128>}, {pipeline_mode = #tpu.pipeline_mode<synchronous>, transform_indices = @transform_1, window_bounds = array<i64: 1, 128>}, {transform_indices = @transform_2, window_bounds = array<i64: 1>}, {transform_indices = @transform_3, window_bounds = array<i64: 1, 128>}]} {
    %c0 = arith.constant 0 : index
    %c0_0 = arith.constant 0 : index
    %0 = vector.load %arg2[%c0, %c0_0] : memref<1x128xf32, #tpu.memory_space<vmem>>, vector<1x128xf32>
    %c0_1 = arith.constant 0 : index
    %c0_2 = arith.constant 0 : index
    %1 = vector.load %arg1[%c0_1, %c0_2] : memref<128x128xf32, #tpu.memory_space<vmem>>, vector<128x128xf32>
    %cst = arith.constant dense<0.000000e+00> : vector<1x128xf32>
    %2 = tpu.matmul %0, %1, %cst {dimension_numbers = #tpu.dot_dimension_numbers<[1], [1], [0], [0], [0, 0, 1, 0], [], []>} : vector<1x128xf32>, vector<128x128xf32>, vector<1x128xf32> -> vector<1x128xf32>
    %c0_3 = arith.constant 0 : index
    %3 = memref.load %arg3[%c0_3] : memref<1xf32, #tpu.memory_space<smem>>
    %4 = vector.broadcast %3 : f32 to vector<1x128xf32>
    %5 = arith.addf %2, %4 : vector<1x128xf32>
    %c0_4 = arith.constant 0 : index
    %c0_5 = arith.constant 0 : index
    %6 = vector.load %arg4[%c0_4, %c0_5] : memref<1x128xf32, #tpu.memory_space<vmem>>, vector<1x128xf32>
    tpu.vector_store %arg4[%c0_4, %c0_5], %5 {strides = array<i32>} : memref<1x128xf32, #tpu.memory_space<vmem>>, vector<1x128xf32>,
    return
  }
  func.func @transform_0(%arg0: i32) -> (i32, i32) {
    %c0_i32 = arith.constant 0 : i32
    %c0_i32_0 = arith.constant 0 : i32
    return %arg0, %c0_i32 : i32, i32
  }
  func.func @transform_1(%arg0: i32) -> (i32, i32) {
    %c0_i32 = arith.constant 0 : i32
    %c0_i32_0 = arith.constant 0 : i32
    %c0_i32_1 = arith.constant 0 : i32
    return %c0_i32, %c0_i32_0 : i32, i32
  }
  func.func @transform_2(%arg0: i32) -> i32 {
    %c0_i32 = arith.constant 0 : i32
    %c0_i32_0 = arith.constant 0 : i32
    return %c0_i32 : i32
  }
  func.func @transform_3(%arg0: i32) -> (i32, i32) {
    %c0_i32 = arith.constant 0 : i32
    %c0_i32_0 = arith.constant 0 : i32
    return %c0_i32, %arg0 : i32, i32
  }
}

</mosaic_0001>

<llo_original>
// kernel: multiframe_critic_scores.1
$region0: #{multiframe_critic_scores.1}
  #allocation0 [shape = 'u32[]', space=smem, size = 0x4, offset = 0x4, fixed_abs, tag = 'smem constant byte address 0x4 - core index']
  #allocation1 [shape = 'u32[144,128]{1,0:T(1,128)}', space=vmem, size = 0x12000, scoped, tag = 'internal scratch']
  #allocation2 [shape = 'f32[1]{0:T(128)S(6)}', space=smem, size = 0x200, scoped, tag = 'scoped memory for multiframe_critic_scores.1']
  %s0 = inlined_call_operand.hbm [shape: f32[256,128], index: 0, kind: input, shape index: {}]
  %s1 = inlined_call_operand.vmem [shape: f32[1,128], index: 1, kind: input, shape index: {}]
  %s2 = inlined_call_operand.<no memory space> [shape: f32[1], index: 2, kind: input, shape index: {}]
  %s3 = inlined_call_operand.hbm [shape: f32[1,256], index: 3, kind: output, shape index: {}]
  %s4 = sld [smem:[#allocation0]]
  $region49: #{multiframe_critic_scores.1} parent=0
    _
  %s6 = ssub.s32 1, %s4
  %s7 = scalar_select 0, %s6, %s4
  %8 = sst [smem:[#allocation2]] %s2
  $region1: #{multiframe_critic_scores.1} parent=0
    #allocation3 [shape = 'u8[131072]{0}', space=vmem, size = 0x20000, scoped, tag = 'input window, operand 0']
    #allocation4 [shape = 's32[2]{0}', space=sflag, size = 0x8, scoped, tag = 'scoped memory for multiframe_critic_scores.1']
    #allocation5 [shape = 's32[2]{0}', space=sflag, size = 0x8, scoped, tag = 'scoped memory for multiframe_critic_scores.1']
    #allocation6 [shape = 'u8[1024]{0}', space=vmem, size = 0x400, scoped, tag = 'output window, operand 0']
    %9 = vsyncpa [#allocation4], 0
    %s10 = scalar_lea.sflag [#allocation4], 1
    %11 = vsyncpa %s10, 0
    %12 = vsyncpa [#allocation5], 0
    %s13 = scalar_lea.sflag [#allocation5], 1
    %14 = vsyncpa %s13, 0
    loop: start=0, step=1, limit=4
    $region2: #{multiframe_critic_scores.1} parent=1 // loop_pre_header
      _
    $region3: #{multiframe_critic_scores.1} parent=1 // loop_header
      %s16 = sphi 0, %s20
      %p17 = scmp.ge.s32.totalorder %s16, 4
      %s26 = sphi 0, %s28
      %s29 = sphi 0, %s26
      %s30 = sphi 0, %s29
      %s46 = sphi 0, %s30
      %s50 = sphi 0, %s50
      %s52 = sphi 0, %s50
      %s53 = sphi 0, %s52
      %s67 = sphi 0, %s53
      %s71 = sphi 0, %s71
      %s73 = sphi 0, %s71
      %s74 = sphi 0, %s73
      %s88 = sphi 0, %s74
      %s94 = sphi 0, %s96
      %s97 = sphi 0, %s94
      %s98 = sphi 0, %s97
      %s114 = sphi 0, %s98
    $region4: #{multiframe_critic_scores.1} parent=1 // loop_header_branch
      %19 = sbr.rel (%p17) target = $region8
    $region5: #{multiframe_critic_scores.1} parent=1 // loop_body
      %s21 = ssub.s32 %s16, 1
      %s22 = ssub.s32 %s16, 2
      %s23 = sadd.s32 %s16, 1
      %s24 = ssub.s32 %s16, %s23
      %p25 = scmp.eq.s32.totalorder %s24, 0
      %s27 = sadd.s32 %s26, 1
      %s28 = scalar_select %p25, %s26, %s27
      %p31 = pneg %p25
      %p32 = scmp.eq.s32.totalorder %s16, 1
      %p33 = por %p31, %p32
      %p34 = scmp.ne.s32.totalorder %s26, %s29
      %p35 = scmp.eq.s32.totalorder %s16, 0
      %p36 = por %p34, %p35
      %p37 = scmp.ne.s32.totalorder %s26, %s29
      %p38 = scmp.eq.s32.totalorder %s21, 1
      %p39 = por %p37, %p38
      %p40 = scmp.ne.s32.totalorder %s29, %s30
      %p41 = scmp.eq.s32.totalorder %s21, 0
      %p42 = por %p40, %p41
      %p43 = scmp.ne.s32.totalorder %s29, %s30
      %p44 = scmp.eq.s32.totalorder %s22, 1
      %p45 = por %p43, %p44
      %p47 = scmp.ne.s32.totalorder %s30, %s46
      %p48 = scmp.eq.s32.totalorder %s22, 0
      %p49 = por %p47, %p48
      %s51 = sadd.s32 %s50, 1
      %p54 = scmp.eq.s32.totalorder %s16, 1
      %p55 = scmp.ne.s32.totalorder %s50, %s52
      %p56 = scmp.eq.s32.totalorder %s16, 0
      %p57 = por %p55, %p56
      %p58 = scmp.ne.s32.totalorder %s50, %s52
      %p59 = scmp.eq.s32.totalorder %s21, 1
      %p60 = por %p58, %p59
      %p61 = scmp.ne.s32.totalorder %s52, %s53
      %p62 = scmp.eq.s32.totalorder %s21, 0
      %p63 = por %p61, %p62
      %p64 = scmp.ne.s32.totalorder %s52, %s53
      %p65 = scmp.eq.s32.totalorder %s22, 1
      %p66 = por %p64, %p65
      %p68 = scmp.ne.s32.totalorder %s53, %s67
      %p69 = scmp.eq.s32.totalorder %s22, 0
      %p70 = por %p68, %p69
      %s72 = sadd.s32 %s71, 1
      %p75 = scmp.eq.s32.totalorder %s16, 1
      %p76 = scmp.ne.s32.totalorder %s71, %s73
      %p77 = scmp.eq.s32.totalorder %s16, 0
      %p78 = por %p76, %p77
      %p79 = scmp.ne.s32.totalorder %s71, %s73
      %p80 = scmp.eq.s32.totalorder %s21, 1
      %p81 = por %p79, %p80
      %p82 = scmp.ne.s32.totalorder %s73, %s74
      %p83 = scmp.eq.s32.totalorder %s21, 0
      %p84 = por %p82, %p83
      %p85 = scmp.ne.s32.totalorder %s73, %s74
      %p86 = scmp.eq.s32.totalorder %s22, 1
      %p87 = por %p85, %p86
      %p89 = scmp.ne.s32.totalorder %s74, %s88
      %p90 = scmp.eq.s32.totalorder %s22, 0
      %p91 = por %p89, %p90
      %s92 = ssub.s32 %s16, %s23
      %p93 = scmp.eq.s32.totalorder %s92, 0
      %s95 = sadd.s32 %s94, 1
      %s96 = scalar_select %p93, %s94, %s95
      %p99 = pneg %p93
      %p100 = scmp.eq.s32.totalorder %s16, 1
      %p101 = por %p99, %p100
      %p102 = scmp.ne.s32.totalorder %s94, %s97
      %p103 = scmp.eq.s32.totalorder %s16, 0
      %p104 = por %p102, %p103
      %p105 = scmp.ne.s32.totalorder %s94, %s97
      %p106 = scmp.eq.s32.totalorder %s21, 1
      %p107 = por %p105, %p106
      %p108 = scmp.ne.s32.totalorder %s97, %s98
      %p109 = scmp.eq.s32.totalorder %s21, 0
      %p110 = por %p108, %p109
      %p111 = scmp.ne.s32.totalorder %s97, %s98
      %p112 = scmp.eq.s32.totalorder %s22, 1
      %p113 = por %p111, %p112
      %p115 = scmp.ne.s32.totalorder %s98, %s114
      %p116 = scmp.eq.s32.totalorder %s22, 0
      %p117 = por %p115, %p116
      %p118 = scmp.le.s32.totalorder 1, %s16
      %p119 = scmp.lt.s32.totalorder %s16, 3
      %p120 = pnand %p118, %p119
      %p121 = pneg %p120
      // Predicated region
      $region9: #{multiframe_critic_scores.1} parent=5 // pred_check
        _
      $region10: #{multiframe_critic_scores.1} parent=5 // pred_check_branch
        %123 = sbr.rel (%p120) target = $region12
      $region11: #{multiframe_critic_scores.1} parent=5 // pred_region
        %s124 = ssub.s32 %s16, 1
        // Predicated region
        $region13: #{multiframe_critic_scores.1} parent=11 // pred_check
          %p125 = pneg %p63
        $region14: #{multiframe_critic_scores.1} parent=11 // pred_check_branch
          %127 = sbr.rel (%p125) target = $region16
        $region15: #{multiframe_critic_scores.1} parent=11 // pred_region
          _
        $region16: #{multiframe_critic_scores.1} parent=11 // pred_fallthru
          _
        // Predicated region
        $region17: #{multiframe_critic_scores.1} parent=11 // pred_check
          %p128 = pneg %p84
        $region18: #{multiframe_critic_scores.1} parent=11 // pred_check_branch
          %130 = sbr.rel (%p128) target = $region20
        $region19: #{multiframe_critic_scores.1} parent=11 // pred_region
          _
        $region20: #{multiframe_critic_scores.1} parent=11 // pred_fallthru
          _
      $region12: #{multiframe_critic_scores.1} parent=5 // pred_fallthru
        _
      %p131 = scmp.lt.s32.totalorder %s16, 2
      // Predicated region
      $region21: #{multiframe_critic_scores.1} parent=5 // pred_check
        %p132 = pneg %p131
      $region22: #{multiframe_critic_scores.1} parent=5 // pred_check_branch
        %134 = sbr.rel (%p132) target = $region24
      $region23: #{multiframe_critic_scores.1} parent=5 // pred_region
        // Predicated region
        $region25: #{multiframe_critic_scores.1} parent=23 // pred_check
          %p135 = pneg %p36
        $region26: #{multiframe_critic_scores.1} parent=23 // pred_check_branch
          %137 = sbr.rel (%p135) target = $region28
        $region27: #{multiframe_critic_scores.1} parent=23 // pred_region
          %s138 = sand.u32 %s26, 1
          %s139 = scalar_lea.sflag [#allocation4], %s138
          %s140 = sand.u32 %s26, 1
          %s141 = smul.addr %s140, 128
          %s142 = scalar_lea.vmem [#allocation3], %s141
          %s143 = smul.u32 16, %s16
          %s145 = ssub.s32 2048, 2048
          %146 = vsyncadd %s139, %s145
          %s147 = smul.addr %s143, 128
          %s148 = scalar_lea.hbm %s0, %s147
          %s149 = sshll.u32 %s142, 4
          %s150 = int_to_ptr.vmem [resolvable:$true] %s149
          %155 = dma.hbm_to_vmem [thread:$0]  %s148, 2048, %s150, %s139, 128, 128, 8
        $region28: #{multiframe_critic_scores.1} parent=23 // pred_fallthru
          _
      $region24: #{multiframe_critic_scores.1} parent=5 // pred_fallthru
        _
      %p156 = scmp.le.s32.totalorder 1, %s16
      %p157 = scmp.lt.s32.totalorder %s16, 3
      %p158 = pnand %p156, %p157
      %p159 = pneg %p158
      // Predicated region
      $region29: #{multiframe_critic_scores.1} parent=5 // pred_check
        _
      $region30: #{multiframe_critic_scores.1} parent=5 // pred_check_branch
        %161 = sbr.rel (%p158) target = $region32
      $region31: #{multiframe_critic_scores.1} parent=5 // pred_region
        %s162 = ssub.s32 %s16, 1
        %s163 = sand.u32 %s29, 1
        %s164 = scalar_lea.sflag [#allocation4], %s163
        %s165 = sand.u32 %s29, 1
        %s166 = smul.addr %s165, 128
        %s167 = scalar_lea.vmem [#allocation3], %s166
        // Predicated region
        $region33: #{multiframe_critic_scores.1} parent=31 // pred_check
          %p168 = pneg %p42
        $region34: #{multiframe_critic_scores.1} parent=31 // pred_check_branch
          %170 = sbr.rel (%p168) target = $region36
        $region35: #{multiframe_critic_scores.1} parent=31 // pred_region
          %171 = dma.done %s164, 2048
        $region36: #{multiframe_critic_scores.1} parent=31 // pred_fallthru
          _
        %s172 = sand.u32 %s29, 1
        %s173 = scalar_lea.sflag [#allocation4], %s172
        %s174 = sand.u32 %s29, 1
        %s175 = smul.addr %s174, 128
        %s176 = scalar_lea.vmem [#allocation3], %s175
        %p177 = pneg %p42
        %p178 = pneg %p39
        %p179 = pneg %p63
        %p180 = pneg %p60
        %p181 = pneg %p84
        %p182 = pneg %p81
        %p183 = pneg %p110
        %p184 = pneg %p107
        %s185 = sand.u32 %s97, 1
        %s186 = scalar_lea.sflag [#allocation5], %s185
        %s187 = sand.u32 %s97, 1
        %s188 = scalar_lea.vmem [#allocation6], %s187
        %s189 = smul.u32 16, %s21
        %v190 = vld [vmem:[%s1] sm:$0x1]
        %v191 = vld [vmem:[%s167] sm:$0xff]
        %v192 = vld [vmem:[%s167 + $0x8] sm:$0xff]
        %v193 = vld [vmem:[%s167 + $0x10] sm:$0xff]
        %v194 = vld [vmem:[%s167 + $0x18] sm:$0xff]
        %v195 = vld [vmem:[%s167 + $0x20] sm:$0xff]
        %v196 = vld [vmem:[%s167 + $0x28] sm:$0xff]
        %v197 = vld [vmem:[%s167 + $0x30] sm:$0xff]
        %v198 = vld [vmem:[%s167 + $0x38] sm:$0xff]
        %v199 = vld [vmem:[%s167 + $0x40] sm:$0xff]
        %v200 = vld [vmem:[%s167 + $0x48] sm:$0xff]
        %v201 = vld [vmem:[%s167 + $0x50] sm:$0xff]
        %v202 = vld [vmem:[%s167 + $0x58] sm:$0xff]
        %v203 = vld [vmem:[%s167 + $0x60] sm:$0xff]
        %v204 = vld [vmem:[%s167 + $0x68] sm:$0xff]
        %v205 = vld [vmem:[%s167 + $0x70] sm:$0xff]
        %v206 = vld [vmem:[%s167 + $0x78] sm:$0xff]
        %s207 = sld [smem:[#allocation2]]
        %v208 = vstv %s207
        %209 = vmatprep.subr.mxu0 0.0
        %210 = vmatpush1.xpose.msra.mxu0 %v191
        %211 = vmatprep.subr.mxu0 0.0
        %212 = vmatpush1.xpose.msra.mxu0 %v192
        %213 = vmatprep.subr.mxu0 0.0
        %214 = vmatpush1.xpose.msra.mxu0 %v193
        %215 = vmatprep.subr.mxu0 0.0
        %216 = vmatpush1.xpose.msra.mxu0 %v194
        %217 = vmatprep.subr.mxu0 0.0
        %218 = vmatpush1.xpose.msra.mxu0 %v195
        %219 = vmatprep.subr.mxu0 0.0
        %220 = vmatpush1.xpose.msra.mxu0 %v196
        %221 = vmatprep.subr.mxu0 0.0
        %222 = vmatpush1.xpose.msra.mxu0 %v197
        %223 = vmatprep.subr.mxu0 0.0
        %224 = vmatpush1.xpose.msra.mxu0 %v198
        %225 = vmatprep.subr.mxu0 0.0
        %226 = vmatpush1.xpose.msra.mxu0 %v199
        %227 = vmatprep.subr.mxu0 0.0
        %228 = vmatpush1.xpose.msra.mxu0 %v200
        %229 = vmatprep.subr.mxu0 0.0
        %230 = vmatpush1.xpose.msra.mxu0 %v201
        %231 = vmatprep.subr.mxu0 0.0
        %232 = vmatpush1.xpose.msra.mxu0 %v202
        %233 = vmatprep.subr.mxu0 0.0
        %234 = vmatpush1.xpose.msra.mxu0 %v203
        %235 = vmatprep.subr.mxu0 0.0
        %236 = vmatpush1.xpose.msra.mxu0 %v204
        %237 = vmatprep.subr.mxu0 0.0
        %238 = vmatpush1.xpose.msra.mxu0 %v205
        %239 = vmatprep.subr.mxu0 0.0
        %240 = vmatpush1.xpose.msra.mxu0 %v206
        %241 = vmatprep.subr.mxu0 0.0
        %242 = vmatpush1.xpose.msra.mxu0 0.0
        %243 = vmatprep.subr.mxu0 0.0
        %244 = vmatpush1.xpose.msra.mxu0 0.0
        %245 = vmatprep.subr.mxu0 0.0
        %246 = vmatpush1.xpose.msra.mxu0 0.0
        %247 = vmatprep.subr.mxu0 0.0
        %248 = vmatpush1.xpose.msra.mxu0 0.0
        %249 = vmatprep.subr.mxu0 0.0
        %250 = vmatpush1.xpose.msra.mxu0 0.0
        %251 = vmatprep.subr.mxu0 0.0
        %252 = vmatpush1.xpose.msra.mxu0 0.0
        %253 = vmatprep.subr.mxu0 0.0
        %254 = vmatpush1.xpose.msra.mxu0 0.0
        %255 = vmatprep.subr.mxu0 0.0
        %256 = vmatpush1.xpose.msra.mxu0 0.0
        %257 = vmatprep.subr.mxu0 0.0
        %258 = vmatpush1.xpose.msra.mxu0 0.0
        %259 = vmatprep.subr.mxu0 0.0
        %260 = vmatpush1.xpose.msra.mxu0 0.0
        %261 = vmatprep.subr.mxu0 0.0
        %262 = vmatpush1.xpose.msra.mxu0 0.0
        %263 = vmatprep.subr.mxu0 0.0
        %264 = vmatpush1.xpose.msra.mxu0 0.0
        %265 = vmatprep.subr.mxu0 0.0
        %266 = vmatpush1.xpose.msra.mxu0 0.0
        %267 = vmatprep.subr.mxu0 0.0
        %268 = vmatpush1.xpose.msra.mxu0 0.0
        %269 = vmatprep.subr.mxu0 0.0
        %270 = vmatpush1.xpose.msra.mxu0 0.0
        %271 = vmatprep.subr.mxu0 0.0
        %272 = vmatpush1.xpose.msra.mxu0 0.0
        %273 = vmatprep.mubr.f32.mxu0 0.0
        %274 = vmatmul.mubr.f32.gmra.mrb[0].mxu0 %v190
        %v275 = vpop.f32.mrb[0].mxu0
        %v276 = vadd.f32 %v208, %v275
        %v277 = vpop.f32.mrb[0].mxu0
        %278 = vdwg.mxu0
        %279 = vst [vmem:[%s188] sm:$0x1] %v276
        %s280 = sand.u32 %s97, 1
        %s281 = scalar_lea.sflag [#allocation5], %s280
        %s282 = sand.u32 %s97, 1
        %s283 = scalar_lea.vmem [#allocation6], %s282
        // Predicated region
        $region37: #{multiframe_critic_scores.1} parent=31 // pred_check
          %p284 = pneg %p107
        $region38: #{multiframe_critic_scores.1} parent=31 // pred_check_branch
          %286 = sbr.rel (%p284) target = $region40
        $region39: #{multiframe_critic_scores.1} parent=31 // pred_region
          %s288 = ssub.s32 16, 16
          %289 = vsyncadd %s281, %s288
          %s290 = smul.addr %s21, 16
          %s291 = scalar_lea.hbm %s3, %s290
          %s293 = sshll.u32 %s283, 4
          %s294 = int_to_ptr.vmem [resolvable:$true] %s293
          %296 = dma.vmem_to_hbm [thread:$0]  %s294, 16, %s291, %s281
        $region40: #{multiframe_critic_scores.1} parent=31 // pred_fallthru
          _
      $region32: #{multiframe_critic_scores.1} parent=5 // pred_fallthru
        _
      %p297 = scmp.le.s32.totalorder 2, %s16
      // Predicated region
      $region41: #{multiframe_critic_scores.1} parent=5 // pred_check
        %p298 = pneg %p297
      $region42: #{multiframe_critic_scores.1} parent=5 // pred_check_branch
        %300 = sbr.rel (%p298) target = $region44
      $region43: #{multiframe_critic_scores.1} parent=5 // pred_region
        %s301 = ssub.s32 %s16, 2
        // Predicated region
        $region45: #{multiframe_critic_scores.1} parent=43 // pred_check
          %p302 = pneg %p113
        $region46: #{multiframe_critic_scores.1} parent=43 // pred_check_branch
          %304 = sbr.rel (%p302) target = $region48
        $region47: #{multiframe_critic_scores.1} parent=43 // pred_region
          %s305 = sand.u32 %s98, 1
          %s306 = scalar_lea.sflag [#allocation5], %s305
          %s307 = sand.u32 %s98, 1
          %s308 = scalar_lea.vmem [#allocation6], %s307
          %309 = dma.done %s306, 16
        $region48: #{multiframe_critic_scores.1} parent=43 // pred_fallthru
          _
      $region44: #{multiframe_critic_scores.1} parent=5 // pred_fallthru
        _
    $region6: #{multiframe_critic_scores.1} parent=1 // loop_footer
      %s20 = sadd.s32 1, %s16
    $region7: #{multiframe_critic_scores.1} parent=1 // loop_footer_branch
      %15 = sbr.rel target = $region3
    $region8: #{multiframe_critic_scores.1} parent=1 // loop_exit
      _
    %310 = vsyncpa [#allocation4], 1
    %s311 = scalar_lea.sflag [#allocation4], 1
    %312 = vsyncpa %s311, 1
    %313 = vsyncpa [#allocation5], 1
    %s314 = scalar_lea.sflag [#allocation5], 1
    %315 = vsyncpa %s314, 1

</llo_original>
